<compile_context>
chip_gen: v7x
topology: tpu7x:2x2x1
jax: 0.10.0
libtpu: 0.0.40
codegen_flags: <defaults>
</compile_context>

<pallas_src>
import jax
import jax.numpy as jnp
from jax import lax
from jax.experimental import pallas as pl
from jax.experimental.pallas import tpu as pltpu


def _gather_kernel(idx_ref, tab_ref, out_ref):
    # idx_ref: SMEM (B,) int32   (scalar prefetch)
    # tab_ref: VMEM (n_classes, D) -- whole table resident
    # out_ref: VMEM (B, D)       -- one dense output tile
    n_classes = tab_ref.shape[0]
    B = out_ref.shape[0]

    def body(i, carry):
        row = jnp.clip(idx_ref[i], 0, n_classes - 1)   # guard against OOB ids
        out_ref[i, :] = tab_ref[row, :]
        return carry

    lax.fori_loop(0, B, body, 0, unroll=True)


def class_embed_lookup(indices, emb_table):
    """Pallas embedding gather.  indices: (B,) int32, emb_table: (n_classes, D)."""
    B = indices.shape[0]
    n_classes, D = emb_table.shape
    return pl.pallas_call(
        _gather_kernel,
        out_shape=jax.ShapeDtypeStruct((B, D), emb_table.dtype),
        grid_spec=pltpu.PrefetchScalarGridSpec(
            num_scalar_prefetch=1,
            grid=(1,),
            # Full-extent table block: one big DMA, table stays VMEM-resident.
            in_specs=[pl.BlockSpec((n_classes, D), lambda i, idx: (0, 0))],
            # Single dense (B, D) output block: one unmasked store + writeback.
            out_specs=pl.BlockSpec((B, D), lambda i, idx: (0, 0)),
        ),
        compiler_params=pltpu.CompilerParams(
            dimension_semantics=("arbitrary",)),
    )(indices.astype(jnp.int32), emb_table)


class ClassEmbedder:
    def __init__(self, embed_dim, n_classes=1000, key='class', ucg_rate=0.1,
                 param_rng=jax.random.PRNGKey(42)):
        self.key = key
        self.n_classes = n_classes
        self.ucg_rate = ucg_rate
        # nn.Embedding(n_classes, embed_dim) weight ~ N(0, 1), deterministic init.
        self.embedding = jax.random.normal(
            param_rng, (n_classes, embed_dim), dtype=jnp.float32)

    def __call__(self, batch, key=None, disable_dropout=False,
                 dropout_rng=jax.random.PRNGKey(1)):
        # NOTE: callers should thread a fresh dropout_rng per training step;
        # the default key is only for deterministic testing.
        if key is None:
            key = self.key
        c = batch[key][:, None]                                   # (B, 1)
        c = c.astype(jnp.int32)
        if self.ucg_rate > 0.0 and not disable_dropout:
            # With prob ucg_rate, replace class id with the "unconditional"
            # class n_classes-1 (integer select, no float round-trip).
            drop = jax.random.bernoulli(dropout_rng, self.ucg_rate, c.shape)
            c = jnp.where(drop, jnp.int32(self.n_classes - 1), c)
        flat = c.reshape(-1)                                      # (B*1,)
        emb = class_embed_lookup(flat, self.embedding)            # (B*1, D)
        return emb.reshape(c.shape[0], c.shape[1], -1)            # (B, 1, D)

    def get_unconditional_conditioning(self, bs):
        uc_class = self.n_classes - 1
        uc = jnp.ones((bs,), dtype=jnp.int32) * uc_class
        return {self.key: uc}


if __name__ == "__main__":
    B, embed_dim, n_classes = 8, 128, 1000

    embedder = ClassEmbedder(embed_dim=embed_dim, n_classes=n_classes,
                             key='class', ucg_rate=0.1)

    class_ids = jax.random.randint(jax.random.PRNGKey(0), (B,), 0, n_classes,
                                   dtype=jnp.int32)
    batch = {'class': class_ids}

    # Forward with ucg dropout active (training-mode semantics).
    out = embedder(batch)
    out = jax.block_until_ready(out)
    assert out.shape == (B, 1, embed_dim), out.shape

    # Forward with dropout disabled -> the Pallas gather must exactly match a
    # plain-JAX embedding lookup.
    out_nodrop = jax.block_until_ready(embedder(batch, disable_dropout=True))
    ref = jnp.take(embedder.embedding, class_ids, axis=0)[:, None, :]
    assert jnp.allclose(out_nodrop, ref), "Pallas gather mismatch"

    # Unconditional conditioning path.
    uc = embedder(embedder.get_unconditional_conditioning(B), disable_dropout=True)
    uc = jax.block_until_ready(uc)
    assert uc.shape == (B, 1, embed_dim)
    ref_uc = jnp.take(embedder.embedding,
                      jnp.full((B,), n_classes - 1, jnp.int32), axis=0)[:, None, :]
    assert jnp.allclose(uc, ref_uc), "Unconditional gather mismatch"

    print("KERNEL_OK")
</pallas_src>

<mosaic_0001>
module attributes {stable_mosaic.version = 11 : i64} {
  func.func @_gather_kernel(%arg0: i32, %arg1: memref<8xi32, #tpu.memory_space<smem>>, %arg2: memref<1000x128xf32, #tpu.memory_space<vmem>>, %arg3: memref<8x128xf32, #tpu.memory_space<vmem>>) attributes {dimension_semantics = [#tpu.dimension_semantics<arbitrary>], iteration_bounds = array<i64: 1>, scalar_prefetch = 1 : i64, scratch_operands = 0 : i64, tpu.core_type = #tpu.core_type<tc>, window_params = [{pipeline_mode = #tpu.pipeline_mode<synchronous>, transform_indices = @transform_0, window_bounds = array<i64: 1000, 128>}, {pipeline_mode = #tpu.pipeline_mode<synchronous>, transform_indices = @transform_1, window_bounds = array<i64: 8, 128>}]} {
    %c0_i32 = arith.constant 0 : i32
    %0 = arith.index_cast %c0_i32 : i32 to index
    %1 = memref.load %arg1[%0] : memref<8xi32, #tpu.memory_space<smem>>
    %c0_i32_0 = arith.constant 0 : i32
    %c999_i32 = arith.constant 999 : i32
    %2 = arith.maxsi %c0_i32_0, %1 : i32
    %3 = arith.minsi %c999_i32, %2 : i32
    %4 = arith.index_cast %3 : i32 to index
    %c0 = arith.constant 0 : index
    %5 = vector.load %arg2[%4, %c0] : memref<1000x128xf32, #tpu.memory_space<vmem>>, vector<1x128xf32>
    %6 = vector.shape_cast %5 : vector<1x128xf32> to vector<128xf32>
    %7 = arith.index_cast %c0_i32 : i32 to index
    %c0_1 = arith.constant 0 : index
    %8 = vector.load %arg3[%7, %c0_1] : memref<8x128xf32, #tpu.memory_space<vmem>>, vector<1x128xf32>
    %9 = vector.shape_cast %8 : vector<1x128xf32> to vector<128xf32>
    %10 = vector.shape_cast %6 : vector<128xf32> to vector<1x128xf32>
    tpu.vector_store %arg3[%7, %c0_1], %10 {strides = array<i32>} : memref<8x128xf32, #tpu.memory_space<vmem>>, vector<1x128xf32>,
    %c1_i32 = arith.constant 1 : i32
    %11 = arith.index_cast %c1_i32 : i32 to index
    %12 = memref.load %arg1[%11] : memref<8xi32, #tpu.memory_space<smem>>
    %c0_i32_2 = arith.constant 0 : i32
    %c999_i32_3 = arith.constant 999 : i32
    %13 = arith.maxsi %c0_i32_2, %12 : i32
    %14 = arith.minsi %c999_i32_3, %13 : i32
    %15 = arith.index_cast %14 : i32 to index
    %c0_4 = arith.constant 0 : index
    %16 = vector.load %arg2[%15, %c0_4] : memref<1000x128xf32, #tpu.memory_space<vmem>>, vector<1x128xf32>
    %17 = vector.shape_cast %16 : vector<1x128xf32> to vector<128xf32>
    %18 = arith.index_cast %c1_i32 : i32 to index
    %c0_5 = arith.constant 0 : index
    %19 = vector.load %arg3[%18, %c0_5] : memref<8x128xf32, #tpu.memory_space<vmem>>, vector<1x128xf32>
    %20 = vector.shape_cast %19 : vector<1x128xf32> to vector<128xf32>
    %21 = vector.shape_cast %17 : vector<128xf32> to vector<1x128xf32>
    tpu.vector_store %arg3[%18, %c0_5], %21 {strides = array<i32>} : memref<8x128xf32, #tpu.memory_space<vmem>>, vector<1x128xf32>,
    %c2_i32 = arith.constant 2 : i32
    %22 = arith.index_cast %c2_i32 : i32 to index
    %23 = memref.load %arg1[%22] : memref<8xi32, #tpu.memory_space<smem>>
    %c0_i32_6 = arith.constant 0 : i32
    %c999_i32_7 = arith.constant 999 : i32
    %24 = arith.maxsi %c0_i32_6, %23 : i32
    %25 = arith.minsi %c999_i32_7, %24 : i32
    %26 = arith.index_cast %25 : i32 to index
    %c0_8 = arith.constant 0 : index
    %27 = vector.load %arg2[%26, %c0_8] : memref<1000x128xf32, #tpu.memory_space<vmem>>, vector<1x128xf32>
    %28 = vector.shape_cast %27 : vector<1x128xf32> to vector<128xf32>
    %29 = arith.index_cast %c2_i32 : i32 to index
    %c0_9 = arith.constant 0 : index
    %30 = vector.load %arg3[%29, %c0_9] : memref<8x128xf32, #tpu.memory_space<vmem>>, vector<1x128xf32>
    %31 = vector.shape_cast %30 : vector<1x128xf32> to vector<128xf32>
    %32 = vector.shape_cast %28 : vector<128xf32> to vector<1x128xf32>
    tpu.vector_store %arg3[%29, %c0_9], %32 {strides = array<i32>} : memref<8x128xf32, #tpu.memory_space<vmem>>, vector<1x128xf32>,
    %c3_i32 = arith.constant 3 : i32
    %33 = arith.index_cast %c3_i32 : i32 to index
    %34 = memref.load %arg1[%33] : memref<8xi32, #tpu.memory_space<smem>>
    %c0_i32_10 = arith.constant 0 : i32
    %c999_i32_11 = arith.constant 999 : i32
    %35 = arith.maxsi %c0_i32_10, %34 : i32
    %36 = arith.minsi %c999_i32_11, %35 : i32
    %37 = arith.index_cast %36 : i32 to index
    %c0_12 = arith.constant 0 : index
    %38 = vector.load %arg2[%37, %c0_12] : memref<1000x128xf32, #tpu.memory_space<vmem>>, vector<1x128xf32>
    %39 = vector.shape_cast %38 : vector<1x128xf32> to vector<128xf32>
    %40 = arith.index_cast %c3_i32 : i32 to index
    %c0_13 = arith.constant 0 : index
    %41 = vector.load %arg3[%40, %c0_13] : memref<8x128xf32, #tpu.memory_space<vmem>>, vector<1x128xf32>
    %42 = vector.shape_cast %41 : vector<1x128xf32> to vector<128xf32>
    %43 = vector.shape_cast %39 : vector<128xf32> to vector<1x128xf32>
    tpu.vector_store %arg3[%40, %c0_13], %43 {strides = array<i32>} : memref<8x128xf32, #tpu.memory_space<vmem>>, vector<1x128xf32>,
    %c4_i32 = arith.constant 4 : i32
    %44 = arith.index_cast %c4_i32 : i32 to index
    %45 = memref.load %arg1[%44] : memref<8xi32, #tpu.memory_space<smem>>
    %c0_i32_14 = arith.constant 0 : i32
    %c999_i32_15 = arith.constant 999 : i32
    %46 = arith.maxsi %c0_i32_14, %45 : i32
    %47 = arith.minsi %c999_i32_15, %46 : i32
    %48 = arith.index_cast %47 : i32 to index
    %c0_16 = arith.constant 0 : index
    %49 = vector.load %arg2[%48, %c0_16] : memref<1000x128xf32, #tpu.memory_space<vmem>>, vector<1x128xf32>
    %50 = vector.shape_cast %49 : vector<1x128xf32> to vector<128xf32>
    %51 = arith.index_cast %c4_i32 : i32 to index
    %c0_17 = arith.constant 0 : index
    %52 = vector.load %arg3[%51, %c0_17] : memref<8x128xf32, #tpu.memory_space<vmem>>, vector<1x128xf32>
    %53 = vector.shape_cast %52 : vector<1x128xf32> to vector<128xf32>
    %54 = vector.shape_cast %50 : vector<128xf32> to vector<1x128xf32>
    tpu.vector_store %arg3[%51, %c0_17], %54 {strides = array<i32>} : memref<8x128xf32, #tpu.memory_space<vmem>>, vector<1x128xf32>,
    %c5_i32 = arith.constant 5 : i32
    %55 = arith.index_cast %c5_i32 : i32 to index
    %56 = memref.load %arg1[%55] : memref<8xi32, #tpu.memory_space<smem>>
    %c0_i32_18 = arith.constant 0 : i32
    %c999_i32_19 = arith.constant 999 : i32
    %57 = arith.maxsi %c0_i32_18, %56 : i32
    %58 = arith.minsi %c999_i32_19, %57 : i32
    %59 = arith.index_cast %58 : i32 to index
    %c0_20 = arith.constant 0 : index
    %60 = vector.load %arg2[%59, %c0_20] : memref<1000x128xf32, #tpu.memory_space<vmem>>, vector<1x128xf32>
    %61 = vector.shape_cast %60 : vector<1x128xf32> to vector<128xf32>
    %62 = arith.index_cast %c5_i32 : i32 to index
    %c0_21 = arith.constant 0 : index
    %63 = vector.load %arg3[%62, %c0_21] : memref<8x128xf32, #tpu.memory_space<vmem>>, vector<1x128xf32>
    %64 = vector.shape_cast %63 : vector<1x128xf32> to vector<128xf32>
    %65 = vector.shape_cast %61 : vector<128xf32> to vector<1x128xf32>
    tpu.vector_store %arg3[%62, %c0_21], %65 {strides = array<i32>} : memref<8x128xf32, #tpu.memory_space<vmem>>, vector<1x128xf32>,
    %c6_i32 = arith.constant 6 : i32
    %66 = arith.index_cast %c6_i32 : i32 to index
    %67 = memref.load %arg1[%66] : memref<8xi32, #tpu.memory_space<smem>>
    %c0_i32_22 = arith.constant 0 : i32
    %c999_i32_23 = arith.constant 999 : i32
    %68 = arith.maxsi %c0_i32_22, %67 : i32
    %69 = arith.minsi %c999_i32_23, %68 : i32
    %70 = arith.index_cast %69 : i32 to index
    %c0_24 = arith.constant 0 : index
    %71 = vector.load %arg2[%70, %c0_24] : memref<1000x128xf32, #tpu.memory_space<vmem>>, vector<1x128xf32>
    %72 = vector.shape_cast %71 : vector<1x128xf32> to vector<128xf32>
    %73 = arith.index_cast %c6_i32 : i32 to index
    %c0_25 = arith.constant 0 : index
    %74 = vector.load %arg3[%73, %c0_25] : memref<8x128xf32, #tpu.memory_space<vmem>>, vector<1x128xf32>
    %75 = vector.shape_cast %74 : vector<1x128xf32> to vector<128xf32>
    %76 = vector.shape_cast %72 : vector<128xf32> to vector<1x128xf32>
    tpu.vector_store %arg3[%73, %c0_25], %76 {strides = array<i32>} : memref<8x128xf32, #tpu.memory_space<vmem>>, vector<1x128xf32>,
    %c7_i32 = arith.constant 7 : i32
    %77 = arith.index_cast %c7_i32 : i32 to index
    %78 = memref.load %arg1[%77] : memref<8xi32, #tpu.memory_space<smem>>
    %c0_i32_26 = arith.constant 0 : i32
    %c999_i32_27 = arith.constant 999 : i32
    %79 = arith.maxsi %c0_i32_26, %78 : i32
    %80 = arith.minsi %c999_i32_27, %79 : i32
    %81 = arith.index_cast %80 : i32 to index
    %c0_28 = arith.constant 0 : index
    %82 = vector.load %arg2[%81, %c0_28] : memref<1000x128xf32, #tpu.memory_space<vmem>>, vector<1x128xf32>
    %83 = vector.shape_cast %82 : vector<1x128xf32> to vector<128xf32>
    %84 = arith.index_cast %c7_i32 : i32 to index
    %c0_29 = arith.constant 0 : index
    %85 = vector.load %arg3[%84, %c0_29] : memref<8x128xf32, #tpu.memory_space<vmem>>, vector<1x128xf32>
    %86 = vector.shape_cast %85 : vector<1x128xf32> to vector<128xf32>
    %87 = vector.shape_cast %83 : vector<128xf32> to vector<1x128xf32>
    tpu.vector_store %arg3[%84, %c0_29], %87 {strides = array<i32>} : memref<8x128xf32, #tpu.memory_space<vmem>>, vector<1x128xf32>,
    %c8_i32 = arith.constant 8 : i32
    return
  }
  func.func @transform_0(%arg0: i32, %arg1: memref<8xi32, #tpu.memory_space<smem>>) -> (i32, i32) {
    %c0_i32 = arith.constant 0 : i32
    %c0_i32_0 = arith.constant 0 : i32
    %c0_i32_1 = arith.constant 0 : i32
    return %c0_i32, %c0_i32_0 : i32, i32
  }
  func.func @transform_1(%arg0: i32, %arg1: memref<8xi32, #tpu.memory_space<smem>>) -> (i32, i32) {
    %c0_i32 = arith.constant 0 : i32
    %c0_i32_0 = arith.constant 0 : i32
    %c0_i32_1 = arith.constant 0 : i32
    return %c0_i32, %c0_i32_0 : i32, i32
  }
}

</mosaic_0001>

<llo_original>
// kernel: tpu_custom_call.1
$region0: #{tpu_custom_call.1}
  #allocation0 [shape = 'u32[]', space=smem, size = 0x4, offset = 0x4, fixed_abs, tag = 'smem constant byte address 0x4 - core index']
  #allocation1 [shape = 'u32[144,128]{1,0:T(1,128)}', space=vmem, size = 0x12000, scoped, tag = 'internal scratch']
  #allocation2 [shape = 's32[1]{0}', space=sflag, size = 0x4, scoped, tag = 'scoped memory for tpu_custom_call.1']
  #allocation3 [shape = 'u8[512]{0}', space=smem, size = 0x200, scoped, tag = 'prefetched SMEM operand 0']
  %s0 = inlined_call_operand.hbm [shape: s32[8], index: 0, kind: input, shape index: {}]
  %s1 = inlined_call_operand.hbm [shape: f32[1000,128], index: 1, kind: input, shape index: {}]
  %s2 = inlined_call_operand.hbm [shape: f32[8,128], index: 2, kind: output, shape index: {}]
  %s3 = sld [smem:[#allocation0]]
  $region18: #{tpu_custom_call.1} parent=0
    _
  %s5 = ssub.s32 1, %s3
  %s6 = scalar_select 0, %s5, %s3
  %8 = dma.hbm_to_smem %s0, 16, [#allocation3], [#allocation2]
  %9 = dma.done [#allocation2], 16
  %10 = sfence
  $region1: #{tpu_custom_call.1} parent=0
    #allocation4 [shape = 'u8[512000]{0}', space=vmem, size = 0x7d000, scoped, tag = 'input window, operand 1, single buffered']
    #allocation5 [shape = 's32[1]{0}', space=sflag, size = 0x4, scoped, tag = 'scoped memory for tpu_custom_call.1']
    #allocation6 [shape = 's32[1]{0}', space=sflag, size = 0x4, scoped, tag = 'scoped memory for tpu_custom_call.1']
    #allocation7 [shape = 'u8[4096]{0}', space=vmem, size = 0x1000, scoped, tag = 'output window, operand 0, single buffered']
    %11 = vsyncpa [#allocation5], 0
    %12 = vsyncpa [#allocation6], 0
    // Predicated region
    $region2: #{tpu_custom_call.1} parent=1 // pred_check
      _
    $region3: #{tpu_custom_call.1} parent=1 // pred_check_branch
      %14 = sbr.rel (0) target = $region5
    $region4: #{tpu_custom_call.1} parent=1 // pred_region
      %s16 = ssub.s32 16000, 16000
      %17 = vsyncadd [#allocation5], %s16
      %s18 = sshll.u32 [#allocation4], 4
      %s19 = int_to_ptr.vmem [resolvable:$true] %s18
      %24 = dma.hbm_to_vmem [thread:$0]  %s1, 16000, %s19, [#allocation5], 128, 128, 8
    $region5: #{tpu_custom_call.1} parent=1 // pred_fallthru
      _
    // Predicated region
    $region6: #{tpu_custom_call.1} parent=1 // pred_check
      _
    $region7: #{tpu_custom_call.1} parent=1 // pred_check_branch
      %26 = sbr.rel (0) target = $region9
    $region8: #{tpu_custom_call.1} parent=1 // pred_region
      %27 = dma.done [#allocation5], 16000
    $region9: #{tpu_custom_call.1} parent=1 // pred_fallthru
      _
    %s28 = sld [smem:[#allocation3]]
    %p29 = scmp.gt.s32.totalorder %s28, 0
    %s30 = scalar_select %p29, %s28, 0
    %p31 = scmp.lt.s32.totalorder %s30, 999
    %s32 = scalar_select %p31, %s30, 999
    %s33 = scalar_lea.vmem [#allocation4], %s32
    %v34 = vld [vmem:[%s33] sm:$0x1]
    %35 = vst [vmem:[#allocation7] sm:$0x1] %v34
    %s36 = sld [smem:[#allocation3 + $0x1]]
    %p37 = scmp.gt.s32.totalorder %s36, 0
    %s38 = scalar_select %p37, %s36, 0
    %p39 = scmp.lt.s32.totalorder %s38, 999
    %s40 = scalar_select %p39, %s38, 999
    %s41 = scalar_lea.vmem [#allocation4], %s40
    %v42 = vld [vmem:[%s41] sm:$0x1]
    %43 = vst [vmem:[#allocation7 + $0x1] sm:$0x1] %v42
    %s44 = sld [smem:[#allocation3 + $0x2]]
    %p45 = scmp.gt.s32.totalorder %s44, 0
    %s46 = scalar_select %p45, %s44, 0
    %p47 = scmp.lt.s32.totalorder %s46, 999
    %s48 = scalar_select %p47, %s46, 999
    %s49 = scalar_lea.vmem [#allocation4], %s48
    %v50 = vld [vmem:[%s49] sm:$0x1]
    %51 = vst [vmem:[#allocation7 + $0x2] sm:$0x1] %v50
    %s52 = sld [smem:[#allocation3 + $0x3]]
    %p53 = scmp.gt.s32.totalorder %s52, 0
    %s54 = scalar_select %p53, %s52, 0
    %p55 = scmp.lt.s32.totalorder %s54, 999
    %s56 = scalar_select %p55, %s54, 999
    %s57 = scalar_lea.vmem [#allocation4], %s56
    %v58 = vld [vmem:[%s57] sm:$0x1]
    %59 = vst [vmem:[#allocation7 + $0x3] sm:$0x1] %v58
    %s60 = sld [smem:[#allocation3 + $0x4]]
    %p61 = scmp.gt.s32.totalorder %s60, 0
    %s62 = scalar_select %p61, %s60, 0
    %p63 = scmp.lt.s32.totalorder %s62, 999
    %s64 = scalar_select %p63, %s62, 999
    %s65 = scalar_lea.vmem [#allocation4], %s64
    %v66 = vld [vmem:[%s65] sm:$0x1]
    %67 = vst [vmem:[#allocation7 + $0x4] sm:$0x1] %v66
    %s68 = sld [smem:[#allocation3 + $0x5]]
    %p69 = scmp.gt.s32.totalorder %s68, 0
    %s70 = scalar_select %p69, %s68, 0
    %p71 = scmp.lt.s32.totalorder %s70, 999
    %s72 = scalar_select %p71, %s70, 999
    %s73 = scalar_lea.vmem [#allocation4], %s72
    %v74 = vld [vmem:[%s73] sm:$0x1]
    %75 = vst [vmem:[#allocation7 + $0x5] sm:$0x1] %v74
    %s76 = sld [smem:[#allocation3 + $0x6]]
    %p77 = scmp.gt.s32.totalorder %s76, 0
    %s78 = scalar_select %p77, %s76, 0
    %p79 = scmp.lt.s32.totalorder %s78, 999
    %s80 = scalar_select %p79, %s78, 999
    %s81 = scalar_lea.vmem [#allocation4], %s80
    %v82 = vld [vmem:[%s81] sm:$0x1]
    %83 = vst [vmem:[#allocation7 + $0x6] sm:$0x1] %v82
    %s84 = sld [smem:[#allocation3 + $0x7]]
    %p85 = scmp.gt.s32.totalorder %s84, 0
    %s86 = scalar_select %p85, %s84, 0
    %p87 = scmp.lt.s32.totalorder %s86, 999
    %s88 = scalar_select %p87, %s86, 999
    %s89 = scalar_lea.vmem [#allocation4], %s88
    %v90 = vld [vmem:[%s89] sm:$0x1]
    %91 = vst [vmem:[#allocation7 + $0x7] sm:$0x1] %v90
    // Predicated region
    $region10: #{tpu_custom_call.1} parent=1 // pred_check
      _
    $region11: #{tpu_custom_call.1} parent=1 // pred_check_branch
      %93 = sbr.rel (0) target = $region13
    $region12: #{tpu_custom_call.1} parent=1 // pred_region
      %s95 = ssub.s32 128, 128
      %96 = vsyncadd [#allocation6], %s95
      %s98 = sshll.u32 [#allocation7], 4
      %s99 = int_to_ptr.vmem [resolvable:$true] %s98
      %101 = dma.vmem_to_hbm [thread:$0]  %s99, 128, %s2, [#allocation6]
    $region13: #{tpu_custom_call.1} parent=1 // pred_fallthru
      _
    // Predicated region
    $region14: #{tpu_custom_call.1} parent=1 // pred_check
      _
    $region15: #{tpu_custom_call.1} parent=1 // pred_check_branch
      %103 = sbr.rel (0) target = $region17
    $region16: #{tpu_custom_call.1} parent=1 // pred_region
      %104 = dma.done [#allocation6], 128
    $region17: #{tpu_custom_call.1} parent=1 // pred_fallthru
      _
    %105 = vsyncpa [#allocation5], 1
    %106 = vsyncpa [#allocation6], 1

</llo_original>
